<compile_context>
chip_gen: v6e
topology: v6e:2x2x1
jax: 0.10.0
libtpu: 0.0.40
codegen_flags: <defaults>
</compile_context>

<pallas_src>
import functools

import jax
import jax.numpy as jnp
from jax.experimental import pallas as pl
from jax.experimental.pallas import tpu as pltpu

SQRT2 = 1.4142135623730951
SQRT_2_OVER_PI = 0.7978845608028654


def _round_up(n, m):
    return ((n + m - 1) // m) * m


def _vmem_budget():
    # Capability query only (never masks kernel/compile errors): 75% of the
    # per-core VMEM, 48 MiB fallback (safe on v7x's 64 MiB).
    try:
        cap = getattr(pltpu.get_tpu_info(), "vmem_capacity_bytes", 64 << 20)
    except Exception:
        cap = 64 << 20
    return int(cap) * 3 // 4


def _gelu(h, kind):
    if kind == "tanh":
        # tanh-approx GELU: transcendental goes to the EUP slot (free next to
        # the MXU); max abs deviation from exact erf GELU is ~1e-3.
        return 0.5 * h * (1.0 + jnp.tanh(SQRT_2_OVER_PI * (h + 0.044715 * h * h * h)))
    # Exact erf -- torch.nn.GELU() default numerics (f32 VPU polynomial).
    return 0.5 * h * (1.0 + jax.lax.erf(h * (1.0 / SQRT2)))


def ffn_resident_kernel(x_ref, w1_ref, b1_ref, w2_ref, b2_ref, o_ref, *, gelu):
    # x_ref: (tm, K) input dtype; w1_ref: (K, N1) bf16; b1_ref: (1, N1) f32
    # w2_ref: (N1, K) bf16;       b2_ref: (1, K) f32;  o_ref: (tm, K)
    x = x_ref[...].astype(w1_ref.dtype)          # in-kernel cast (VPU, hidden under MXU)
    h = jnp.dot(x, w1_ref[...], preferred_element_type=jnp.float32) + b1_ref[...]
    h = _gelu(h, gelu)
    y = jnp.dot(h.astype(w2_ref.dtype), w2_ref[...],
                preferred_element_type=jnp.float32) + b2_ref[...]
    o_ref[...] = y.astype(o_ref.dtype)


def ffn_streamed_kernel(x_ref, w1_ref, b1_ref, w2_ref, b2_ref, o_ref, acc_ref, *, gelu):
    # Di-streamed variant: hidden dim is tiled on the trailing ("arbitrary")
    # grid axis; f32 accumulator in VMEM scratch, init/finalize via pl.when.
    j = pl.program_id(1)

    @pl.when(j == 0)
    def _():
        acc_ref[...] = jnp.zeros_like(acc_ref)

    x = x_ref[...].astype(w1_ref.dtype)
    h = jnp.dot(x, w1_ref[...], preferred_element_type=jnp.float32) + b1_ref[...]
    h = _gelu(h, gelu)
    acc_ref[...] += jnp.dot(h.astype(w2_ref.dtype), w2_ref[...],
                            preferred_element_type=jnp.float32)

    @pl.when(j == pl.num_programs(1) - 1)
    def _():
        o_ref[...] = (acc_ref[...] + b2_ref[...]).astype(o_ref.dtype)


def feed_forward(x, w1, b1, w2, b2, *, tm=256, matmul_dtype=jnp.bfloat16, gelu="tanh"):
    """y = GELU(x @ w1 + b1) @ w2 + b2 for x: (B, S, D).

    w1: (D, Di), b1: (Di,), w2: (Di, D), b2: (D,) -- weights already stored
    transposed vs PyTorch's (out, in) layout so y = x @ W + b.
    """
    B, S, D = x.shape
    Di = w1.shape[1]
    M = B * S
    out_dtype = x.dtype
    itm = jnp.dtype(matmul_dtype).itemsize
    x_it = jnp.dtype(x.dtype).itemsize
    o_it = jnp.dtype(out_dtype).itemsize
    vmem_budget = _vmem_budget()

    # ---- lane packing: P logical rows per 128-lane row when D < 128 --------
    pack = (D < 128) and (128 % D == 0)
    P = 128 // D if pack else 1
    K, N1 = P * D, P * Di            # feature / hidden dims as seen by the kernel

    # ---- row tiling ----------------------------------------------------------
    sub = 8 * P if pack else 16      # keep 8 dense sublanes (16 rows for bf16 packing)
    if M % P == 0 and M <= max(tm, sub):
        # Whole slab in one block (block dims == array dims: always legal);
        # avoids any pad / slice copies for small inputs.
        tm_eff, M_pad, n_tiles = M, M, 1
    else:
        tm_cap = max(sub, _round_up(tm, sub))
        n_tiles = pl.cdiv(M, tm_cap)
        if n_tiles == 1 and M > 2 * sub:
            n_tiles = 2              # v7x: two TensorCores -> >= 2 parallel row steps
        tm_eff = _round_up(pl.cdiv(M, n_tiles), sub)
        M_pad = n_tiles * tm_eff
    tmd = tm_eff // P                # dense (packed) rows per tile
    Md = M_pad // P
    # TODO(synk): handle a non-aligned row tail with BoundedSlice / masked
    # stores instead of padding when M is large and badly aligned.

    # ---- operands ------------------------------------------------------------
    x2 = x.reshape(M, D)
    if M_pad != M:
        x2 = jnp.pad(x2, ((0, M_pad - M), (0, 0)))
    x2 = x2.reshape(Md, K)           # row-major metadata reshape; dtype unchanged
    w1c = w1.astype(matmul_dtype)
    w2c = w2.astype(matmul_dtype)
    b1f = b1.astype(jnp.float32)
    b2f = b2.astype(jnp.float32)
    if pack:
        eye = jnp.eye(P, dtype=matmul_dtype)
        w1c = jnp.kron(eye, w1c)     # (K, N1) block-diagonal
        w2c = jnp.kron(eye, w2c)     # (N1, K) block-diagonal
        b1f = jnp.tile(b1f, P)
        b2f = jnp.tile(b2f, P)
    b1f = b1f.reshape(1, N1)
    b2f = b2f.reshape(1, K)

    # ---- resident vs. Di-streamed path (VMEM-budget gated) -------------------
    resident_bytes = (
        2 * (K * N1 + N1 * K) * itm          # weights (assume double-buffered)
        + 2 * (N1 + K) * 4                   # biases (f32)
        + 2 * tmd * K * (x_it + o_it)        # x / out row tiles (double-buffered)
        + tmd * N1 * 4                       # f32 hidden activation
    )
    use_resident = pack or resident_bytes <= vmem_budget

    flops = 4 * Md * K * N1
    cost = pl.CostEstimate(
        flops=flops,
        transcendentals=M_pad * Di,
        bytes_accessed=int(M_pad * D * (x_it + o_it)
                           + (K * N1 + N1 * K) * itm + (N1 + K) * 4),
    )

    if use_resident:
        vmem_limit = int(min(vmem_budget, max(16 << 20, resident_bytes + (4 << 20))))
        out2 = pl.pallas_call(
            functools.partial(ffn_resident_kernel, gelu=gelu),
            out_shape=jax.ShapeDtypeStruct((Md, K), out_dtype),
            grid_spec=pltpu.PrefetchScalarGridSpec(
                num_scalar_prefetch=0,
                grid=(n_tiles,),
                in_specs=[
                    pl.BlockSpec((tmd, K), lambda i: (i, 0)),   # x rows (lane-dense)
                    pl.BlockSpec((K, N1), lambda i: (0, 0)),    # W1 (grid-invariant)
                    pl.BlockSpec((1, N1), lambda i: (0, 0)),    # b1
                    pl.BlockSpec((N1, K), lambda i: (0, 0)),    # W2
                    pl.BlockSpec((1, K), lambda i: (0, 0)),     # b2
                ],
                out_specs=pl.BlockSpec((tmd, K), lambda i: (i, 0)),
            ),
            compiler_params=pltpu.CompilerParams(
                dimension_semantics=("parallel",),
                vmem_limit_bytes=vmem_limit,
            ),
            cost_estimate=cost,
        )(x2, w1c, b1f, w2c, b2f)
    else:
        # Stream W1/W2 in Di-chunks (large D/Di that would blow VMEM, e.g. v7x).
        tdi = next((t for t in (4096, 2048, 1024, 512, 256, 128) if N1 % t == 0), N1)
        streamed_bytes = (2 * 2 * K * tdi * itm + 2 * (tdi + K) * 4
                          + 2 * tmd * K * (x_it + o_it)
                          + tmd * tdi * 4 + tmd * K * 4)
        vmem_limit = int(min(vmem_budget, max(16 << 20, streamed_bytes + (4 << 20))))
        out2 = pl.pallas_call(
            functools.partial(ffn_streamed_kernel, gelu=gelu),
            out_shape=jax.ShapeDtypeStruct((Md, K), out_dtype),
            grid_spec=pltpu.PrefetchScalarGridSpec(
                num_scalar_prefetch=0,
                grid=(n_tiles, N1 // tdi),          # reduction (Di) axis last
                in_specs=[
                    pl.BlockSpec((tmd, K), lambda i, j: (i, 0)),
                    pl.BlockSpec((K, tdi), lambda i, j: (0, j)),
                    pl.BlockSpec((1, tdi), lambda i, j: (0, j)),
                    pl.BlockSpec((tdi, K), lambda i, j: (j, 0)),
                    pl.BlockSpec((1, K), lambda i, j: (0, 0)),
                ],
                out_specs=pl.BlockSpec((tmd, K), lambda i, j: (i, 0)),
                scratch_shapes=[pltpu.VMEM((tmd, K), jnp.float32)],
            ),
            compiler_params=pltpu.CompilerParams(
                dimension_semantics=("parallel", "arbitrary"),
                vmem_limit_bytes=vmem_limit,
            ),
            cost_estimate=cost,
        )(x2, w1c, b1f, w2c, b2f)

    out2 = out2.reshape(M_pad, D)
    if M_pad != M:
        out2 = out2[:M]
    return out2.reshape(B, S, D)


def feed_forward_ref(x, w1, b1, w2, b2):
    # Exact (erf) GELU reference == torch.nn.GELU() default numerics, f32.
    h = jnp.dot(x, w1) + b1
    h = 0.5 * h * (1.0 + jax.lax.erf(h / SQRT2))
    return jnp.dot(h, w2) + b2


if __name__ == "__main__":
    # Module config: dim=32, mult=4 -> dim_inner=128
    dim, mult = 32, 4
    dim_inner = int(dim * mult)
    B, S = 2, 8

    key = jax.random.PRNGKey(0)
    kx, k1, k2, k3, k4 = jax.random.split(key, 5)

    x = jax.random.normal(kx, (B, S, dim), dtype=jnp.float32)

    # Deterministic parameter init (uniform like nn.Linear's default bound
    # 1/sqrt(fan_in)), stored already transposed for y = x @ W + b.
    bound1 = 1.0 / (dim ** 0.5)
    w1 = jax.random.uniform(k1, (dim, dim_inner), jnp.float32, -bound1, bound1)
    b1 = jax.random.uniform(k2, (dim_inner,), jnp.float32, -bound1, bound1)
    bound2 = 1.0 / (dim_inner ** 0.5)
    w2 = jax.random.uniform(k3, (dim_inner, dim), jnp.float32, -bound2, bound2)
    b2 = jax.random.uniform(k4, (dim,), jnp.float32, -bound2, bound2)

    out = feed_forward(x, w1, b1, w2, b2)
    out = jax.block_until_ready(out)

    ref = feed_forward_ref(x, w1, b1, w2, b2)
    assert out.shape == (B, S, dim)
    # bf16 matmul operands with f32 accumulation + tanh GELU vs exact f32 ref.
    err = float(jnp.max(jnp.abs(out - ref)))
    assert jnp.allclose(out, ref, atol=3e-2, rtol=3e-2), err

    print("KERNEL_OK")
</pallas_src>

<mosaic_0001>
module attributes {stable_mosaic.version = 11 : i64} {
  func.func @ffn_resident_kernel(%arg0: i32, %arg1: memref<4x128xf32, #tpu.memory_space<vmem>>, %arg2: memref<128x512xbf16, #tpu.memory_space<vmem>>, %arg3: memref<1x512xf32, #tpu.memory_space<vmem>>, %arg4: memref<512x128xbf16, #tpu.memory_space<vmem>>, %arg5: memref<1x128xf32, #tpu.memory_space<vmem>>, %arg6: memref<4x128xf32, #tpu.memory_space<vmem>>) attributes {dimension_semantics = [#tpu.dimension_semantics<parallel>], iteration_bounds = array<i64: 1>, scalar_prefetch = 0 : i64, scratch_operands = 0 : i64, tpu.core_type = #tpu.core_type<tc>, window_params = [{transform_indices = @transform_0, window_bounds = array<i64: 4, 128>}, {pipeline_mode = #tpu.pipeline_mode<synchronous>, transform_indices = @transform_1, window_bounds = array<i64: 128, 512>}, {pipeline_mode = #tpu.pipeline_mode<synchronous>, transform_indices = @transform_2, window_bounds = array<i64: 1, 512>}, {pipeline_mode = #tpu.pipeline_mode<synchronous>, transform_indices = @transform_3, window_bounds = array<i64: 512, 128>}, {pipeline_mode = #tpu.pipeline_mode<synchronous>, transform_indices = @transform_4, window_bounds = array<i64: 1, 128>}, {transform_indices = @transform_5, window_bounds = array<i64: 4, 128>}]} {
    %c0 = arith.constant 0 : index
    %c0_0 = arith.constant 0 : index
    %0 = vector.load %arg1[%c0, %c0_0] : memref<4x128xf32, #tpu.memory_space<vmem>>, vector<4x128xf32>
    %1 = arith.truncf %0 : vector<4x128xf32> to vector<4x128xbf16>
    %c0_1 = arith.constant 0 : index
    %c0_2 = arith.constant 0 : index
    %2 = vector.load %arg2[%c0_1, %c0_2] : memref<128x512xbf16, #tpu.memory_space<vmem>>, vector<128x512xbf16>
    %cst = arith.constant dense<0.000000e+00> : vector<4x512xf32>
    %3 = tpu.matmul %1, %2, %cst {dimension_numbers = #tpu.dot_dimension_numbers<[1], [0], [0], [1], [0, 0, 1, 1], [], []>} : vector<4x128xbf16>, vector<128x512xbf16>, vector<4x512xf32> -> vector<4x512xf32>
    %c0_3 = arith.constant 0 : index
    %c0_4 = arith.constant 0 : index
    %4 = vector.load %arg3[%c0_3, %c0_4] : memref<1x512xf32, #tpu.memory_space<vmem>>, vector<1x512xf32>
    %5 = vector.broadcast %4 : vector<1x512xf32> to vector<4x512xf32>
    %6 = arith.addf %3, %5 : vector<4x512xf32>
    %cst_5 = arith.constant 5.000000e-01 : f32
    %7 = vector.broadcast %cst_5 : f32 to vector<4x512xf32>
    %8 = arith.mulf %7, %6 : vector<4x512xf32>
    %cst_6 = arith.constant 4.471500e-02 : f32
    %9 = vector.broadcast %cst_6 : f32 to vector<4x512xf32>
    %10 = arith.mulf %9, %6 : vector<4x512xf32>
    %11 = arith.mulf %10, %6 : vector<4x512xf32>
    %12 = arith.mulf %11, %6 : vector<4x512xf32>
    %13 = arith.addf %6, %12 : vector<4x512xf32>
    %cst_7 = arith.constant 0.797884583 : f32
    %14 = vector.broadcast %cst_7 : f32 to vector<4x512xf32>
    %15 = arith.mulf %14, %13 : vector<4x512xf32>
    %16 = math.tanh %15 : vector<4x512xf32>
    %cst_8 = arith.constant 1.000000e+00 : f32
    %17 = vector.broadcast %cst_8 : f32 to vector<4x512xf32>
    %18 = arith.addf %17, %16 : vector<4x512xf32>
    %19 = arith.mulf %8, %18 : vector<4x512xf32>
    %20 = arith.truncf %19 : vector<4x512xf32> to vector<4x512xbf16>
    %c0_9 = arith.constant 0 : index
    %c0_10 = arith.constant 0 : index
    %21 = vector.load %arg4[%c0_9, %c0_10] : memref<512x128xbf16, #tpu.memory_space<vmem>>, vector<512x128xbf16>
    %cst_11 = arith.constant dense<0.000000e+00> : vector<4x128xf32>
    %22 = tpu.matmul %20, %21, %cst_11 {dimension_numbers = #tpu.dot_dimension_numbers<[1], [0], [0], [1], [0, 0, 1, 1], [], []>} : vector<4x512xbf16>, vector<512x128xbf16>, vector<4x128xf32> -> vector<4x128xf32>
    %c0_12 = arith.constant 0 : index
    %c0_13 = arith.constant 0 : index
    %23 = vector.load %arg5[%c0_12, %c0_13] : memref<1x128xf32, #tpu.memory_space<vmem>>, vector<1x128xf32>
    %24 = vector.broadcast %23 : vector<1x128xf32> to vector<4x128xf32>
    %25 = arith.addf %22, %24 : vector<4x128xf32>
    %c0_14 = arith.constant 0 : index
    %c0_15 = arith.constant 0 : index
    %26 = vector.load %arg6[%c0_14, %c0_15] : memref<4x128xf32, #tpu.memory_space<vmem>>, vector<4x128xf32>
    tpu.vector_store %arg6[%c0_14, %c0_15], %25 {strides = array<i32>} : memref<4x128xf32, #tpu.memory_space<vmem>>, vector<4x128xf32>,
    return
  }
  func.func @transform_0(%arg0: i32) -> (i32, i32) {
    %c0_i32 = arith.constant 0 : i32
    %c0_i32_0 = arith.constant 0 : i32
    return %arg0, %c0_i32 : i32, i32
  }
  func.func @transform_1(%arg0: i32) -> (i32, i32) {
    %c0_i32 = arith.constant 0 : i32
    %c0_i32_0 = arith.constant 0 : i32
    %c0_i32_1 = arith.constant 0 : i32
    return %c0_i32, %c0_i32_0 : i32, i32
  }
  func.func @transform_2(%arg0: i32) -> (i32, i32) {
    %c0_i32 = arith.constant 0 : i32
    %c0_i32_0 = arith.constant 0 : i32
    %c0_i32_1 = arith.constant 0 : i32
    return %c0_i32, %c0_i32_0 : i32, i32
  }
  func.func @transform_3(%arg0: i32) -> (i32, i32) {
    %c0_i32 = arith.constant 0 : i32
    %c0_i32_0 = arith.constant 0 : i32
    %c0_i32_1 = arith.constant 0 : i32
    return %c0_i32, %c0_i32_0 : i32, i32
  }
  func.func @transform_4(%arg0: i32) -> (i32, i32) {
    %c0_i32 = arith.constant 0 : i32
    %c0_i32_0 = arith.constant 0 : i32
    %c0_i32_1 = arith.constant 0 : i32
    return %c0_i32, %c0_i32_0 : i32, i32
  }
  func.func @transform_5(%arg0: i32) -> (i32, i32) {
    %c0_i32 = arith.constant 0 : i32
    %c0_i32_0 = arith.constant 0 : i32
    return %arg0, %c0_i32 : i32, i32
  }
}

</mosaic_0001>

<llo_original>
// kernel: tpu_custom_call.1
$region0: #{tpu_custom_call.1}
  #allocation0 [shape = 'u32[]', space=smem, size = 0x4, offset = 0x4, fixed_abs, tag = 'smem constant byte address 0x4 - core index']
  #allocation1 [shape = 'u32[144,128]{1,0:T(1,128)}', space=vmem, size = 0x12000, scoped, tag = 'internal scratch']
  %s0 = inlined_call_operand.hbm [shape: f32[4,128], index: 0, kind: input, shape index: {}]
  %s1 = inlined_call_operand.hbm [shape: bf16[128,512], index: 1, kind: input, shape index: {}]
  %s2 = inlined_call_operand.hbm [shape: f32[1,512], index: 2, kind: input, shape index: {}]
  %s3 = inlined_call_operand.hbm [shape: bf16[512,128], index: 3, kind: input, shape index: {}]
  %s4 = inlined_call_operand.vmem [shape: f32[1,128], index: 4, kind: input, shape index: {}]
  %s5 = inlined_call_operand.hbm [shape: f32[4,128], index: 5, kind: output, shape index: {}]
  %s6 = sld [smem:[#allocation0]]
  $region46: #{tpu_custom_call.1} parent=0
    _
  %s8 = ssub.s32 1, %s6
  %s9 = scalar_select 0, %s8, %s6
  $region1: #{tpu_custom_call.1} parent=0
    #allocation2 [shape = 'u8[2048]{0}', space=vmem, size = 0x800, scoped, tag = 'input window, operand 0, single buffered']
    #allocation3 [shape = 's32[1]{0}', space=sflag, size = 0x4, scoped, tag = 'scoped memory for tpu_custom_call.1']
    #allocation4 [shape = 's32[1]{0}', space=sflag, size = 0x4, scoped, tag = 'scoped memory for tpu_custom_call.1']
    #allocation5 [shape = 'u8[131072]{0}', space=vmem, size = 0x20000, scoped, tag = 'input window, operand 1, single buffered']
    #allocation6 [shape = 's32[1]{0}', space=sflag, size = 0x4, scoped, tag = 'scoped memory for tpu_custom_call.1']
    #allocation7 [shape = 'u8[2048]{0}', space=vmem, size = 0x800, scoped, tag = 'input window, operand 2, single buffered']
    #allocation8 [shape = 'u8[131072]{0}', space=vmem, size = 0x20000, scoped, tag = 'input window, operand 3, single buffered']
    #allocation9 [shape = 's32[1]{0}', space=sflag, size = 0x4, scoped, tag = 'scoped memory for tpu_custom_call.1']
    #allocation10 [shape = 'u8[2048]{0}', space=vmem, size = 0x800, scoped, tag = 'output window, operand 0, single buffered']
    %10 = vsyncpa [#allocation3], 0
    %11 = vsyncpa [#allocation6], 0
    %12 = vsyncpa [#allocation9], 0
    %13 = vsyncpa [#allocation4], 0
    // Predicated region
    $region2: #{tpu_custom_call.1} parent=1 // pred_check
      _
    $region3: #{tpu_custom_call.1} parent=1 // pred_check_branch
      %15 = sbr.rel (0) target = $region5
    $region4: #{tpu_custom_call.1} parent=1 // pred_region
      %s17 = ssub.s32 64, 64
      %18 = vsyncadd [#allocation3], %s17
      %s20 = sshll.u32 [#allocation2], 4
      %s21 = int_to_ptr.vmem [resolvable:$true] %s20
      %23 = dma.hbm_to_vmem [thread:$0]  %s0, 64, %s21, [#allocation3]
    $region5: #{tpu_custom_call.1} parent=1 // pred_fallthru
      _
    // Predicated region
    $region6: #{tpu_custom_call.1} parent=1 // pred_check
      _
    $region7: #{tpu_custom_call.1} parent=1 // pred_check_branch
      %25 = sbr.rel (0) target = $region9
    $region8: #{tpu_custom_call.1} parent=1 // pred_region
      %s27 = ssub.s32 4096, 4096
      %28 = vsyncadd [#allocation6], %s27
      %s29 = sshll.u32 [#allocation5], 4
      %s30 = int_to_ptr.vmem [resolvable:$true] %s29
      %35 = dma.hbm_to_vmem [thread:$0]  %s1, 4096, %s30, [#allocation6], 256, 256, 16
    $region9: #{tpu_custom_call.1} parent=1 // pred_fallthru
      _
    // Predicated region
    $region10: #{tpu_custom_call.1} parent=1 // pred_check
      _
    $region11: #{tpu_custom_call.1} parent=1 // pred_check_branch
      %37 = sbr.rel (0) target = $region13
    $region12: #{tpu_custom_call.1} parent=1 // pred_region
      %s39 = ssub.s32 64, 64
      %40 = vsyncadd [#allocation6], %s39
      %s42 = sshll.u32 [#allocation7], 4
      %s43 = int_to_ptr.vmem [resolvable:$true] %s42
      %45 = dma.hbm_to_vmem [thread:$0]  %s2, 64, %s43, [#allocation6]
    $region13: #{tpu_custom_call.1} parent=1 // pred_fallthru
      _
    // Predicated region
    $region14: #{tpu_custom_call.1} parent=1 // pred_check
      _
    $region15: #{tpu_custom_call.1} parent=1 // pred_check_branch
      %47 = sbr.rel (0) target = $region17
    $region16: #{tpu_custom_call.1} parent=1 // pred_region
      %s49 = ssub.s32 4096, 4096
      %50 = vsyncadd [#allocation9], %s49
      %s51 = sshll.u32 [#allocation8], 4
      %s52 = int_to_ptr.vmem [resolvable:$true] %s51
      %57 = dma.hbm_to_vmem [thread:$0]  %s3, 4096, %s52, [#allocation9], 64, 64, 4
    $region17: #{tpu_custom_call.1} parent=1 // pred_fallthru
      _
    // Predicated region
    $region18: #{tpu_custom_call.1} parent=1 // pred_check
      _
    $region19: #{tpu_custom_call.1} parent=1 // pred_check_branch
      %59 = sbr.rel (0) target = $region21
    $region20: #{tpu_custom_call.1} parent=1 // pred_region
      _
    $region21: #{tpu_custom_call.1} parent=1 // pred_fallthru
      _
    // Predicated region
    $region22: #{tpu_custom_call.1} parent=1 // pred_check
      _
    $region23: #{tpu_custom_call.1} parent=1 // pred_check_branch
      %61 = sbr.rel (0) target = $region25
    $region24: #{tpu_custom_call.1} parent=1 // pred_region
      %62 = dma.done [#allocation3], 64
    $region25: #{tpu_custom_call.1} parent=1 // pred_fallthru
      _
    // Predicated region
    $region26: #{tpu_custom_call.1} parent=1 // pred_check
      _
    $region27: #{tpu_custom_call.1} parent=1 // pred_check_branch
      %64 = sbr.rel (0) target = $region29
    $region28: #{tpu_custom_call.1} parent=1 // pred_region
      %65 = dma.done [#allocation6], 4096
    $region29: #{tpu_custom_call.1} parent=1 // pred_fallthru
      _
    // Predicated region
    $region30: #{tpu_custom_call.1} parent=1 // pred_check
      _
    $region31: #{tpu_custom_call.1} parent=1 // pred_check_branch
      %67 = sbr.rel (0) target = $region33
    $region32: #{tpu_custom_call.1} parent=1 // pred_region
      %68 = dma.done [#allocation6], 64
    $region33: #{tpu_custom_call.1} parent=1 // pred_fallthru
      _
    // Predicated region
    $region34: #{tpu_custom_call.1} parent=1 // pred_check
      _
    $region35: #{tpu_custom_call.1} parent=1 // pred_check_branch
      %70 = sbr.rel (0) target = $region37
    $region36: #{tpu_custom_call.1} parent=1 // pred_region
      %71 = dma.done [#allocation9], 4096
    $region37: #{tpu_custom_call.1} parent=1 // pred_fallthru
      _
    %v73 = vld [vmem:[#allocation2] sm:$0xf]
    %v74 = vpack.c.bf16 %v73, %v73
    %v75 = vld [vmem:[#allocation5] sm:$0xff]
    %v76 = vld [vmem:[#allocation5 + $0x8] sm:$0xff]
    %v77 = vld [vmem:[#allocation5 + $0x10] sm:$0xff]
    %v78 = vld [vmem:[#allocation5 + $0x18] sm:$0xff]
    %v79 = vld [vmem:[#allocation5 + $0x20] sm:$0xff]
    %v80 = vld [vmem:[#allocation5 + $0x28] sm:$0xff]
    %v81 = vld [vmem:[#allocation5 + $0x30] sm:$0xff]
    %v82 = vld [vmem:[#allocation5 + $0x38] sm:$0xff]
    %v83 = vld [vmem:[#allocation5 + $0x40] sm:$0xff]
    %v84 = vld [vmem:[#allocation5 + $0x48] sm:$0xff]
    %v85 = vld [vmem:[#allocation5 + $0x50] sm:$0xff]
    %v86 = vld [vmem:[#allocation5 + $0x58] sm:$0xff]
    %v87 = vld [vmem:[#allocation5 + $0x60] sm:$0xff]
    %v88 = vld [vmem:[#allocation5 + $0x68] sm:$0xff]
    %v89 = vld [vmem:[#allocation5 + $0x70] sm:$0xff]
    %v90 = vld [vmem:[#allocation5 + $0x78] sm:$0xff]
    %v91 = vld [vmem:[#allocation5 + $0x80] sm:$0xff]
    %v92 = vld [vmem:[#allocation5 + $0x88] sm:$0xff]
    %v93 = vld [vmem:[#allocation5 + $0x90] sm:$0xff]
    %v94 = vld [vmem:[#allocation5 + $0x98] sm:$0xff]
    %v95 = vld [vmem:[#allocation5 + $0xa0] sm:$0xff]
    %v96 = vld [vmem:[#allocation5 + $0xa8] sm:$0xff]
    %v97 = vld [vmem:[#allocation5 + $0xb0] sm:$0xff]
    %v98 = vld [vmem:[#allocation5 + $0xb8] sm:$0xff]
    %v99 = vld [vmem:[#allocation5 + $0xc0] sm:$0xff]
    %v100 = vld [vmem:[#allocation5 + $0xc8] sm:$0xff]
    %v101 = vld [vmem:[#allocation5 + $0xd0] sm:$0xff]
    %v102 = vld [vmem:[#allocation5 + $0xd8] sm:$0xff]
    %v103 = vld [vmem:[#allocation5 + $0xe0] sm:$0xff]
    %v104 = vld [vmem:[#allocation5 + $0xe8] sm:$0xff]
    %v105 = vld [vmem:[#allocation5 + $0xf0] sm:$0xff]
    %v106 = vld [vmem:[#allocation5 + $0xf8] sm:$0xff]
    %v107 = vld [vmem:[#allocation7] sm:$0xf]
    %v109 = vlaneseq
    %v110 = vshrl.u32 %v109, 7
    %v111 = vsub.s32 0, %v110
    %v112 = vrot.slane %v107, %v111
    %v113 = vlaneseq
    %v114 = vshrl.u32 %v113, 7
    %v115 = vsub.s32 1, %v114
    %v116 = vrot.slane %v107, %v115
    %v117 = vlaneseq
    %v118 = vshrl.u32 %v117, 7
    %v119 = vsub.s32 2, %v118
    %v120 = vrot.slane %v107, %v119
    %v121 = vlaneseq
    %v122 = vshrl.u32 %v121, 7
    %v123 = vsub.s32 3, %v122
    %v124 = vrot.slane %v107, %v123
    %v161 = vunpack.c.l.b16 %v75
    %v162 = vunpack.c.h.b16 %v75
    %v163 = vunpack.c.l.b16 %v76
    %v164 = vunpack.c.h.b16 %v76
    %v165 = vunpack.c.l.b16 %v77
    %v166 = vunpack.c.h.b16 %v77
    %v167 = vunpack.c.l.b16 %v78
    %v168 = vunpack.c.h.b16 %v78
    %v169 = vunpack.c.l.b16 %v79
    %v170 = vunpack.c.h.b16 %v79
    %v171 = vunpack.c.l.b16 %v80
    %v172 = vunpack.c.h.b16 %v80
    %v173 = vunpack.c.l.b16 %v81
    %v174 = vunpack.c.h.b16 %v81
    %v175 = vunpack.c.l.b16 %v82
    %v176 = vunpack.c.h.b16 %v82
    %v177 = vunpack.c.l.b16 %v83
    %v178 = vunpack.c.h.b16 %v83
    %v179 = vunpack.c.l.b16 %v84
    %v180 = vunpack.c.h.b16 %v84
    %v181 = vunpack.c.l.b16 %v85
    %v182 = vunpack.c.h.b16 %v85
    %v183 = vunpack.c.l.b16 %v86
    %v184 = vunpack.c.h.b16 %v86
    %v185 = vunpack.c.l.b16 %v87
    %v186 = vunpack.c.h.b16 %v87
    %v187 = vunpack.c.l.b16 %v88
    %v188 = vunpack.c.h.b16 %v88
    %v189 = vunpack.c.l.b16 %v89
    %v190 = vunpack.c.h.b16 %v89
    %v191 = vunpack.c.l.b16 %v90
    %v192 = vunpack.c.h.b16 %v90
    %v193 = vunpack.c.l.b16 %v91
    %v194 = vunpack.c.h.b16 %v91
    %v195 = vunpack.c.l.b16 %v92
    %v196 = vunpack.c.h.b16 %v92
    %v197 = vunpack.c.l.b16 %v93
    %v198 = vunpack.c.h.b16 %v93
    %v199 = vunpack.c.l.b16 %v94
    %v200 = vunpack.c.h.b16 %v94
    %v201 = vunpack.c.l.b16 %v95
    %v202 = vunpack.c.h.b16 %v95
    %v203 = vunpack.c.l.b16 %v96
    %v204 = vunpack.c.h.b16 %v96
    %v205 = vunpack.c.l.b16 %v97
    %v206 = vunpack.c.h.b16 %v97
    %v207 = vunpack.c.l.b16 %v98
    %v208 = vunpack.c.h.b16 %v98
    %v209 = vunpack.c.l.b16 %v99
    %v210 = vunpack.c.h.b16 %v99
    %v211 = vunpack.c.l.b16 %v100
    %v212 = vunpack.c.h.b16 %v100
    %v213 = vunpack.c.l.b16 %v101
    %v214 = vunpack.c.h.b16 %v101
    %v215 = vunpack.c.l.b16 %v102
    %v216 = vunpack.c.h.b16 %v102
    %v217 = vunpack.c.l.b16 %v103
    %v218 = vunpack.c.h.b16 %v103
    %v219 = vunpack.c.l.b16 %v104
    %v220 = vunpack.c.h.b16 %v104
    %v221 = vunpack.c.l.b16 %v105
    %v222 = vunpack.c.h.b16 %v105
    %v223 = vunpack.c.l.b16 %v106
    %v224 = vunpack.c.h.b16 %v106
    %v225 = vpack.c.b16 %v165, %v161
    %v226 = vpack.c.b16 %v166, %v162
    %v227 = vpack.c.b16 %v167, %v163
    %v228 = vpack.c.b16 %v168, %v164
    %v229 = vpack.c.b16 %v173, %v169
    %v230 = vpack.c.b16 %v174, %v170
    %v231 = vpack.c.b16 %v175, %v171
    %v232 = vpack.c.b16 %v176, %v172
    %v233 = vpack.c.b16 %v181, %v177
    %v234 = vpack.c.b16 %v182, %v178
    %v235 = vpack.c.b16 %v183, %v179
    %v236 = vpack.c.b16 %v184, %v180
    %v237 = vpack.c.b16 %v189, %v185
    %v238 = vpack.c.b16 %v190, %v186
    %v239 = vpack.c.b16 %v191, %v187
    %v240 = vpack.c.b16 %v192, %v188
    %v241 = vpack.c.b16 %v197, %v193
    %v242 = vpack.c.b16 %v198, %v194
    %v243 = vpack.c.b16 %v199, %v195
    %v244 = vpack.c.b16 %v200, %v196
    %v245 = vpack.c.b16 %v205, %v201
    %v246 = vpack.c.b16 %v206, %v202
    %v247 = vpack.c.b16 %v207, %v203
    %v248 = vpack.c.b16 %v208, %v204
    %v249 = vpack.c.b16 %v213, %v209
    %v250 = vpack.c.b16 %v214, %v210
    %v251 = vpack.c.b16 %v215, %v211
    %v252 = vpack.c.b16 %v216, %v212
    %v253 = vpack.c.b16 %v221, %v217
    %v254 = vpack.c.b16 %v222, %v218
    %v255 = vpack.c.b16 %v223, %v219
    %v256 = vpack.c.b16 %v224, %v220
    %289 = vmatprep.subr.bf16.mxu0 %v254
    %290 = vmatpush1.bf16.msra.mxu0 %v253
    %291 = vmatprep.subr.bf16.mxu0 %v250
    %292 = vmatpush1.bf16.msra.mxu0 %v249
    %293 = vmatprep.subr.bf16.mxu0 %v246
    %294 = vmatpush1.bf16.msra.mxu0 %v245
    %295 = vmatprep.subr.bf16.mxu0 %v242
    %296 = vmatpush1.bf16.msra.mxu0 %v241
    %297 = vmatprep.subr.bf16.mxu0 %v238
    %298 = vmatpush1.bf16.msra.mxu0 %v237
    %299 = vmatprep.subr.bf16.mxu0 %v234
    %300 = vmatpush1.bf16.msra.mxu0 %v233
    %301 = vmatprep.subr.bf16.mxu0 %v230
    %302 = vmatpush1.bf16.msra.mxu0 %v229
    %303 = vmatprep.subr.bf16.mxu0 %v226
    %304 = vmatpush1.bf16.msra.mxu0 %v225
    %305 = vmatprep.subr.bf16.mxu0 0
    %306 = vmatpush2.bf16.msra.mxu0 0
    %307 = vmatprep.subr.bf16.mxu0 0
    %308 = vmatpush2.bf16.msra.mxu0 0
    %309 = vmatprep.subr.bf16.mxu0 0
    %310 = vmatpush2.bf16.msra.mxu0 0
    %311 = vmatprep.subr.bf16.mxu0 0
    %312 = vmatpush2.bf16.msra.mxu0 0
    %313 = vmatprep.subr.bf16.mxu0 0
    %314 = vmatpush2.bf16.msra.mxu0 0
    %315 = vmatprep.subr.bf16.mxu0 0
    %316 = vmatpush2.bf16.msra.mxu0 0
    %317 = vmatprep.subr.bf16.mxu0 0
    %318 = vmatpush2.bf16.msra.mxu0 0
    %319 = vmatprep.subr.bf16.mxu0 0
    %320 = vmatpush2.bf16.msra.mxu0 0
    %321 = vmatprep.mubr.bf16.mxu0 0
    %322 = vmatmul.mubr.bf16.gmra.mxu0 %v74
    %v323 = vpop.f32.mrf.mxu0
    %v324 = vadd.f32 %v112, %v323
    %v325 = vpop.f32.mrf.mxu0
    %v326 = vadd.f32 %v116, %v325
    %v327 = vpop.f32.mrf.mxu0
    %v328 = vpop.f32.mrf.mxu0
    %329 = vdwg.mxu0
    %330 = vmatprep.subr.bf16.mxu0 %v256
    %331 = vmatpush1.bf16.msra.mxu0 %v255
    %332 = vmatprep.subr.bf16.mxu0 %v252
    %333 = vmatpush1.bf16.msra.mxu0 %v251
    %334 = vmatprep.subr.bf16.mxu0 %v248
    %335 = vmatpush1.bf16.msra.mxu0 %v247
    %336 = vmatprep.subr.bf16.mxu0 %v244
    %337 = vmatpush1.bf16.msra.mxu0 %v243
    %338 = vmatprep.subr.bf16.mxu0 %v240
    %339 = vmatpush1.bf16.msra.mxu0 %v239
    %340 = vmatprep.subr.bf16.mxu0 %v236
    %341 = vmatpush1.bf16.msra.mxu0 %v235
    %342 = vmatprep.subr.bf16.mxu0 %v232
    %343 = vmatpush1.bf16.msra.mxu0 %v231
    %344 = vmatprep.subr.bf16.mxu0 %v228
    %345 = vmatpush1.bf16.msra.mxu0 %v227
    %346 = vmatprep.subr.bf16.mxu0 0
    %347 = vmatpush2.bf16.msra.mxu0 0
    %348 = vmatprep.subr.bf16.mxu0 0
    %349 = vmatpush2.bf16.msra.mxu0 0
    %350 = vmatprep.subr.bf16.mxu0 0
    %351 = vmatpush2.bf16.msra.mxu0 0
    %352 = vmatprep.subr.bf16.mxu0 0
    %353 = vmatpush2.bf16.msra.mxu0 0
    %354 = vmatprep.subr.bf16.mxu0 0
    %355 = vmatpush2.bf16.msra.mxu0 0
    %356 = vmatprep.subr.bf16.mxu0 0
    %357 = vmatpush2.bf16.msra.mxu0 0
    %358 = vmatprep.subr.bf16.mxu0 0
    %359 = vmatpush2.bf16.msra.mxu0 0
    %360 = vmatprep.subr.bf16.mxu0 0
    %361 = vmatpush2.bf16.msra.mxu0 0
    %362 = vmatprep.mubr.bf16.mxu0 0
    %363 = vmatmul.mubr.bf16.gmra.mxu0 %v74
    %v364 = vpop.f32.mrf.mxu0
    %v365 = vadd.f32 %v120, %v364
    %v366 = vpop.f32.mrf.mxu0
    %v367 = vadd.f32 %v124, %v366
    %v368 = vpop.f32.mrf.mxu0
    %v369 = vpop.f32.mrf.mxu0
    %370 = vdwg.mxu0
    %v371 = vmul.f32 %v324, 0.5
    %v372 = vmul.f32 %v326, 0.5
    %v373 = vmul.f32 %v365, 0.5
    %v374 = vmul.f32 %v367, 0.5
    %v375 = vmul.f32 %v324, 0.044715
    %v376 = vmul.f32 %v326, 0.044715
    %v377 = vmul.f32 %v365, 0.044715
    %v378 = vmul.f32 %v367, 0.044715
    %v379 = vmul.f32 %v375, %v324
    %v380 = vmul.f32 %v376, %v326
    %v381 = vmul.f32 %v377, %v365
    %v382 = vmul.f32 %v378, %v367
    %v383 = vmul.f32 %v379, %v324
    %v384 = vmul.f32 %v380, %v326
    %v385 = vmul.f32 %v381, %v365
    %v386 = vmul.f32 %v382, %v367
    %v387 = vadd.f32 %v324, %v383
    %v388 = vadd.f32 %v326, %v384
    %v389 = vadd.f32 %v365, %v385
    %v390 = vadd.f32 %v367, %v386
    %v391 = vmul.f32 %v387, 0.7978846
    %v392 = vmul.f32 %v388, 0.7978846
    %v393 = vmul.f32 %v389, 0.7978846
    %v394 = vmul.f32 %v390, 0.7978846
    %v395 = vtanh.pop %v391
    %v396 = vtanh.pop %v392
    %v397 = vtanh.pop %v393
    %v398 = vtanh.pop %v394
    %v399 = vadd.f32 %v395, 1.0
    %v400 = vadd.f32 %v396, 1.0
    %v401 = vadd.f32 %v397, 1.0
    %v402 = vadd.f32 %v398, 1.0
    %v403 = vmul.f32 %v371, %v399
    %v404 = vmul.f32 %v372, %v400
    %v405 = vmul.f32 %v373, %v401
    %v406 = vmul.f32 %v374, %v402
    %v407 = vpack.c.bf16 %v403, %v403
    %v408 = vpack.c.bf16 %v404, %v404
    %v409 = vpack.c.bf16 %v405, %v405
    %v410 = vpack.c.bf16 %v406, %v406
    %v411 = vld [vmem:[#allocation8] sm:$0xf]
    %v412 = vld [vmem:[#allocation8 + $0x4] sm:$0xf]
    %v413 = vld [vmem:[#allocation8 + $0x8] sm:$0xf]
    %v414 = vld [vmem:[#allocation8 + $0xc] sm:$0xf]
    %v415 = vld [vmem:[#allocation8 + $0x10] sm:$0xf]
    %v416 = vld [vmem:[#allocation8 + $0x14] sm:$0xf]
    %v417 = vld [vmem:[#allocation8 + $0x18] sm:$0xf]
    %v418 = vld [vmem:[#allocation8 + $0x1c] sm:$0xf]
    %v419 = vld [vmem:[#allocation8 + $0x20] sm:$0xf]
    %v420 = vld [vmem:[#allocation8 + $0x24] sm:$0xf]
    %v421 = vld [vmem:[#allocation8 + $0x28] sm:$0xf]
    %v422 = vld [vmem:[#allocation8 + $0x2c] sm:$0xf]
    %v423 = vld [vmem:[#allocation8 + $0x30] sm:$0xf]
    %v424 = vld [vmem:[#allocation8 + $0x34] sm:$0xf]
    %v425 = vld [vmem:[#allocation8 + $0x38] sm:$0xf]
    %v426 = vld [vmem:[#allocation8 + $0x3c] sm:$0xf]
    %v427 = vld [vmem:[#allocation8 + $0x40] sm:$0xf]
    %v428 = vld [vmem:[#allocation8 + $0x44] sm:$0xf]
    %v429 = vld [vmem:[#allocation8 + $0x48] sm:$0xf]
    %v430 = vld [vmem:[#allocation8 + $0x4c] sm:$0xf]
    %v431 = vld [vmem:[#allocation8 + $0x50] sm:$0xf]
    %v432 = vld [vmem:[#allocation8 + $0x54] sm:$0xf]
    %v433 = vld [vmem:[#allocation8 + $0x58] sm:$0xf]
    %v434 = vld [vmem:[#allocation8 + $0x5c] sm:$0xf]
    %v435 = vld [vmem:[#allocation8 + $0x60] sm:$0xf]
    %v436 = vld [vmem:[#allocation8 + $0x64] sm:$0xf]
    %v437 = vld [vmem:[#allocation8 + $0x68] sm:$0xf]
    %v438 = vld [vmem:[#allocation8 + $0x6c] sm:$0xf]
    %v439 = vld [vmem:[#allocation8 + $0x70] sm:$0xf]
    %v440 = vld [vmem:[#allocation8 + $0x74] sm:$0xf]
    %v441 = vld [vmem:[#allocation8 + $0x78] sm:$0xf]
    %v442 = vld [vmem:[#allocation8 + $0x7c] sm:$0xf]
    %v443 = vld [vmem:[#allocation8 + $0x80] sm:$0xf]
    %v444 = vld [vmem:[#allocation8 + $0x84] sm:$0xf]
    %v445 = vld [vmem:[#allocation8 + $0x88] sm:$0xf]
    %v446 = vld [vmem:[#allocation8 + $0x8c] sm:$0xf]
    %v447 = vld [vmem:[#allocation8 + $0x90] sm:$0xf]
    %v448 = vld [vmem:[#allocation8 + $0x94] sm:$0xf]
    %v449 = vld [vmem:[#allocation8 + $0x98] sm:$0xf]
    %v450 = vld [vmem:[#allocation8 + $0x9c] sm:$0xf]
    %v451 = vld [vmem:[#allocation8 + $0xa0] sm:$0xf]
    %v452 = vld [vmem:[#allocation8 + $0xa4] sm:$0xf]
    %v453 = vld [vmem:[#allocation8 + $0xa8] sm:$0xf]
    %v454 = vld [vmem:[#allocation8 + $0xac] sm:$0xf]
    %v455 = vld [vmem:[#allocation8 + $0xb0] sm:$0xf]
    %v456 = vld [vmem:[#allocation8 + $0xb4] sm:$0xf]
    %v457 = vld [vmem:[#allocation8 + $0xb8] sm:$0xf]
    %v458 = vld [vmem:[#allocation8 + $0xbc] sm:$0xf]
    %v459 = vld [vmem:[#allocation8 + $0xc0] sm:$0xf]
    %v460 = vld [vmem:[#allocation8 + $0xc4] sm:$0xf]
    %v461 = vld [vmem:[#allocation8 + $0xc8] sm:$0xf]
    %v462 = vld [vmem:[#allocation8 + $0xcc] sm:$0xf]
    %v463 = vld [vmem:[#allocation8 + $0xd0] sm:$0xf]
    %v464 = vld [vmem:[#allocation8 + $0xd4] sm:$0xf]
    %v465 = vld [vmem:[#allocation8 + $0xd8] sm:$0xf]
    %v466 = vld [vmem:[#allocation8 + $0xdc] sm:$0xf]
    %v467 = vld [vmem:[#allocation8 + $0xe0] sm:$0xf]
    %v468 = vld [vmem:[#allocation8 + $0xe4] sm:$0xf]
    %v469 = vld [vmem:[#allocation8 + $0xe8] sm:$0xf]
    %v470 = vld [vmem:[#allocation8 + $0xec] sm:$0xf]
    %v471 = vld [vmem:[#allocation8 + $0xf0] sm:$0xf]
    %v472 = vld [vmem:[#allocation8 + $0xf4] sm:$0xf]
    %v473 = vld [vmem:[#allocation8 + $0xf8] sm:$0xf]
    %v474 = vld [vmem:[#allocation8 + $0xfc] sm:$0xf]
    %v475 = vld [vmem:[%s4] sm:$0x1]
    %v477 = vlaneseq
    %v478 = vshrl.u32 %v477, 7
    %v479 = vsub.s32 0, %v478
    %v480 = vrot.slane %v475, %v479
    %v546 = vunpack.c.l.b16 %v411
    %v547 = vunpack.c.l.b16 %v412
    %v548 = vunpack.c.l.b16 %v413
    %v549 = vunpack.c.l.b16 %v414
    %v550 = vunpack.c.l.b16 %v415
    %v551 = vunpack.c.l.b16 %v416
    %v552 = vunpack.c.l.b16 %v417
    %v553 = vunpack.c.l.b16 %v418
    %v554 = vunpack.c.l.b16 %v419
    %v555 = vunpack.c.l.b16 %v420
    %v556 = vunpack.c.l.b16 %v421
    %v557 = vunpack.c.l.b16 %v422
    %v558 = vunpack.c.l.b16 %v423
    %v559 = vunpack.c.l.b16 %v424
    %v560 = vunpack.c.l.b16 %v425
    %v561 = vunpack.c.l.b16 %v426
    %v562 = vunpack.c.l.b16 %v427
    %v563 = vunpack.c.l.b16 %v428
    %v564 = vunpack.c.l.b16 %v429
    %v565 = vunpack.c.l.b16 %v430
    %v566 = vunpack.c.l.b16 %v431
    %v567 = vunpack.c.l.b16 %v432
    %v568 = vunpack.c.l.b16 %v433
    %v569 = vunpack.c.l.b16 %v434
    %v570 = vunpack.c.l.b16 %v435
    %v571 = vunpack.c.l.b16 %v436
    %v572 = vunpack.c.l.b16 %v437
    %v573 = vunpack.c.l.b16 %v438
    %v574 = vunpack.c.l.b16 %v439
    %v575 = vunpack.c.l.b16 %v440
    %v576 = vunpack.c.l.b16 %v441
    %v577 = vunpack.c.l.b16 %v442
    %v578 = vunpack.c.l.b16 %v443
    %v579 = vunpack.c.l.b16 %v444
    %v580 = vunpack.c.l.b16 %v445
    %v581 = vunpack.c.l.b16 %v446
    %v582 = vunpack.c.l.b16 %v447
    %v583 = vunpack.c.l.b16 %v448
    %v584 = vunpack.c.l.b16 %v449
    %v585 = vunpack.c.l.b16 %v450
    %v586 = vunpack.c.l.b16 %v451
    %v587 = vunpack.c.l.b16 %v452
    %v588 = vunpack.c.l.b16 %v453
    %v589 = vunpack.c.l.b16 %v454
    %v590 = vunpack.c.l.b16 %v455
    %v591 = vunpack.c.l.b16 %v456
    %v592 = vunpack.c.l.b16 %v457
    %v593 = vunpack.c.l.b16 %v458
    %v594 = vunpack.c.l.b16 %v459
    %v595 = vunpack.c.l.b16 %v460
    %v596 = vunpack.c.l.b16 %v461
    %v597 = vunpack.c.l.b16 %v462
    %v598 = vunpack.c.l.b16 %v463
    %v599 = vunpack.c.l.b16 %v464
    %v600 = vunpack.c.l.b16 %v465
    %v601 = vunpack.c.l.b16 %v466
    %v602 = vunpack.c.l.b16 %v467
    %v603 = vunpack.c.l.b16 %v468
    %v604 = vunpack.c.l.b16 %v469
    %v605 = vunpack.c.l.b16 %v470
    %v606 = vunpack.c.l.b16 %v471
    %v607 = vunpack.c.l.b16 %v472
    %v608 = vunpack.c.l.b16 %v473
    %v609 = vunpack.c.l.b16 %v474
    %v610 = vpack.c.b16 %v547, %v546
    %v611 = vpack.c.b16 %v549, %v548
    %v612 = vpack.c.b16 %v551, %v550
    %v613 = vpack.c.b16 %v553, %v552
    %v614 = vpack.c.b16 %v555, %v554
    %v615 = vpack.c.b16 %v557, %v556
    %v616 = vpack.c.b16 %v559, %v558
    %v617 = vpack.c.b16 %v561, %v560
    %v618 = vpack.c.b16 %v563, %v562
    %v619 = vpack.c.b16 %v565, %v564
    %v620 = vpack.c.b16 %v567, %v566
    %v621 = vpack.c.b16 %v569, %v568
    %v622 = vpack.c.b16 %v571, %v570
    %v623 = vpack.c.b16 %v573, %v572
    %v624 = vpack.c.b16 %v575, %v574
    %v625 = vpack.c.b16 %v577, %v576
    %v626 = vpack.c.b16 %v579, %v578
    %v627 = vpack.c.b16 %v581, %v580
    %v628 = vpack.c.b16 %v583, %v582
    %v629 = vpack.c.b16 %v585, %v584
    %v630 = vpack.c.b16 %v587, %v586
    %v631 = vpack.c.b16 %v589, %v588
    %v632 = vpack.c.b16 %v591, %v590
    %v633 = vpack.c.b16 %v593, %v592
    %v634 = vpack.c.b16 %v595, %v594
    %v635 = vpack.c.b16 %v597, %v596
    %v636 = vpack.c.b16 %v599, %v598
    %v637 = vpack.c.b16 %v601, %v600
    %v638 = vpack.c.b16 %v603, %v602
    %v639 = vpack.c.b16 %v605, %v604
    %v640 = vpack.c.b16 %v607, %v606
    %v641 = vpack.c.b16 %v609, %v608
    %674 = vmatprep.subr.bf16.mxu0 0
    %675 = vmatpush1.bf16.msra.mxu0 %v617
    %676 = vmatprep.subr.bf16.mxu0 0
    %677 = vmatpush1.bf16.msra.mxu0 %v616
    %678 = vmatprep.subr.bf16.mxu0 0
    %679 = vmatpush1.bf16.msra.mxu0 %v615
    %680 = vmatprep.subr.bf16.mxu0 0
    %681 = vmatpush1.bf16.msra.mxu0 %v614
    %682 = vmatprep.subr.bf16.mxu0 0
    %683 = vmatpush1.bf16.msra.mxu0 %v613
    %684 = vmatprep.subr.bf16.mxu0 0
    %685 = vmatpush1.bf16.msra.mxu0 %v612
    %686 = vmatprep.subr.bf16.mxu0 0
    %687 = vmatpush1.bf16.msra.mxu0 %v611
    %688 = vmatprep.subr.bf16.mxu0 0
    %689 = vmatpush1.bf16.msra.mxu0 %v610
    %690 = vmatprep.subr.bf16.mxu0 0
    %691 = vmatpush2.bf16.msra.mxu0 %v625
    %692 = vmatprep.subr.bf16.mxu0 0
    %693 = vmatpush2.bf16.msra.mxu0 %v624
    %694 = vmatprep.subr.bf16.mxu0 0
    %695 = vmatpush2.bf16.msra.mxu0 %v623
    %696 = vmatprep.subr.bf16.mxu0 0
    %697 = vmatpush2.bf16.msra.mxu0 %v622
    %698 = vmatprep.subr.bf16.mxu0 0
    %699 = vmatpush2.bf16.msra.mxu0 %v621
    %700 = vmatprep.subr.bf16.mxu0 0
    %701 = vmatpush2.bf16.msra.mxu0 %v620
    %702 = vmatprep.subr.bf16.mxu0 0
    %703 = vmatpush2.bf16.msra.mxu0 %v619
    %704 = vmatprep.subr.bf16.mxu0 0
    %705 = vmatpush2.bf16.msra.mxu0 %v618
    %706 = vmatprep.mubr.bf16.mxu0 %v408
    %707 = vmatmul.mubr.bf16.gmra.mxu0 %v407
    %v708 = vpop.f32.mrf.mxu0
    %v709 = vadd.f32 %v480, %v708
    %v710 = vpop.f32.mrf.mxu0
    %v711 = vpop.f32.mrf.mxu0
    %v712 = vpop.f32.mrf.mxu0
    %713 = vdwg.mxu0
    %714 = vmatprep.subr.bf16.mxu0 0
    %715 = vmatpush1.bf16.msra.mxu0 %v633
    %716 = vmatprep.subr.bf16.mxu0 0
    %717 = vmatpush1.bf16.msra.mxu0 %v632
    %718 = vmatprep.subr.bf16.mxu0 0
    %719 = vmatpush1.bf16.msra.mxu0 %v631
    %720 = vmatprep.subr.bf16.mxu0 0
    %721 = vmatpush1.bf16.msra.mxu0 %v630
    %722 = vmatprep.subr.bf16.mxu0 0
    %723 = vmatpush1.bf16.msra.mxu0 %v629
    %724 = vmatprep.subr.bf16.mxu0 0
    %725 = vmatpush1.bf16.msra.mxu0 %v628
    %726 = vmatprep.subr.bf16.mxu0 0
    %727 = vmatpush1.bf16.msra.mxu0 %v627
    %728 = vmatprep.subr.bf16.mxu0 0
    %729 = vmatpush1.bf16.msra.mxu0 %v626
    %730 = vmatprep.subr.bf16.mxu0 0
    %731 = vmatpush2.bf16.msra.mxu0 %v641
    %732 = vmatprep.subr.bf16.mxu0 0
    %733 = vmatpush2.bf16.msra.mxu0 %v640
    %734 = vmatprep.subr.bf16.mxu0 0
    %735 = vmatpush2.bf16.msra.mxu0 %v639
    %736 = vmatprep.subr.bf16.mxu0 0
    %737 = vmatpush2.bf16.msra.mxu0 %v638
    %738 = vmatprep.subr.bf16.mxu0 0
    %739 = vmatpush2.bf16.msra.mxu0 %v637
    %740 = vmatprep.subr.bf16.mxu0 0
    %741 = vmatpush2.bf16.msra.mxu0 %v636
    %742 = vmatprep.subr.bf16.mxu0 0
    %743 = vmatpush2.bf16.msra.mxu0 %v635
    %744 = vmatprep.subr.bf16.mxu0 0
    %745 = vmatpush2.bf16.msra.mxu0 %v634
    %746 = vmatprep.mubr.bf16.mxu0 %v410
    %747 = vmatmul.mubr.bf16.gmra.mxu0 %v409
    %v748 = vpop.f32.mrf.mxu0
    %v749 = vadd.f32 %v709, %v748
    %v750 = vpop.f32.mrf.mxu0
    %v751 = vpop.f32.mrf.mxu0
    %v752 = vpop.f32.mrf.mxu0
    %753 = vdwg.mxu0
    %754 = vst [vmem:[#allocation10] sm:$0xf] %v749
    // Predicated region
    $region38: #{tpu_custom_call.1} parent=1 // pred_check
      _
    $region39: #{tpu_custom_call.1} parent=1 // pred_check_branch
      %756 = sbr.rel (0) target = $region41
    $region40: #{tpu_custom_call.1} parent=1 // pred_region
      %s758 = ssub.s32 64, 64
      %759 = vsyncadd [#allocation4], %s758
      %s761 = sshll.u32 [#allocation10], 4
      %s762 = int_to_ptr.vmem [resolvable:$true] %s761
      %764 = dma.vmem_to_hbm [thread:$0]  %s762, 64, %s5, [#allocation4]
    $region41: #{tpu_custom_call.1} parent=1 // pred_fallthru
      _
    // Predicated region
    $region42: #{tpu_custom_call.1} parent=1 // pred_check
      _
    $region43: #{tpu_custom_call.1} parent=1 // pred_check_branch
      %766 = sbr.rel (0) target = $region45
    $region44: #{tpu_custom_call.1} parent=1 // pred_region
      %767 = dma.done [#allocation4], 64
    $region45: #{tpu_custom_call.1} parent=1 // pred_fallthru
      _
    %768 = vsyncpa [#allocation3], 1
    %769 = vsyncpa [#allocation6], 1
    %770 = vsyncpa [#allocation9], 1
    %771 = vsyncpa [#allocation4], 1

</llo_original>
